<compile_context>
chip_gen: v5e
topology: v5e:2x2
jax: 0.10.0
libtpu: 0.0.40
codegen_flags: <defaults>
</compile_context>

<pallas_src>
import math
import functools

import jax
import jax.numpy as jnp
from jax.experimental import pallas as pl
from jax.experimental.pallas import tpu as pltpu


# ---------------------------------------------------------------------------
# Kernel
# ---------------------------------------------------------------------------
def _pos_enc_kernel(seed_ref, x_ref, pe_ref, o_ref, *,
                    dropout_p, training, tile_elems):
    x = x_ref[...]                       # (ts, B, D) or (ts, B*D), activation dtype
    pe = pe_ref[...]                     # (ts, D)    or (ts, B*D)

    if pe.ndim == x.ndim:                # lane-dense flattened path (same shape)
        y = x + pe
    else:                                # broadcast the table over the batch axis
        y = x + pe[:, None, :]

    if training and dropout_p > 0.0:
        shape = x.shape
        # Tile-local flat element index (int32 iota, widened to uint32).
        idx = jax.lax.broadcasted_iota(jnp.int32, shape, x.ndim - 1)
        stride = shape[-1]
        for d in range(x.ndim - 2, -1, -1):
            idx = idx + jax.lax.broadcasted_iota(jnp.int32, shape, d) * jnp.int32(stride)
            stride *= shape[d]
        idx = idx.astype(jnp.uint32)

        # Per-grid-step + per-seed offset so every tile gets a fresh mask.
        step = pl.program_id(0).astype(jnp.uint32) * jnp.uint32(tile_elems)
        mix = seed_ref[0].astype(jnp.uint32) * jnp.uint32(0x9E3779B9)
        z = idx + step + mix

        # splitmix32-style hash: VPU-only int mul / xor / shift.
        z = (z ^ (z >> jnp.uint32(16))) * jnp.uint32(0x7FEB352D)
        z = (z ^ (z >> jnp.uint32(15))) * jnp.uint32(0x846CA68B)
        z = z ^ (z >> jnp.uint32(16))

        # Integer threshold compare: P(drop) == dropout_p (full 32-bit precision).
        thresh = jnp.uint32(min(int(dropout_p * (2 ** 32)), 2 ** 32 - 1))
        keep = z >= thresh
        scale = jnp.asarray(1.0 / (1.0 - dropout_p), dtype=y.dtype)
        y = jnp.where(keep, y * scale, jnp.zeros_like(y))

    o_ref[...] = y.astype(o_ref.dtype)


# ---------------------------------------------------------------------------
# Module-equivalent wrapper
# ---------------------------------------------------------------------------
def make_pos_encoding_table(dim_model: int, max_len: int,
                            dtype=jnp.float32) -> jnp.ndarray:
    """Deterministic sin/cos table, identical to the PyTorch __init__."""
    position = jnp.arange(max_len, dtype=jnp.float32)[:, None]               # (L, 1)
    division_term = jnp.exp(
        jnp.arange(0, dim_model, 2, dtype=jnp.float32)
        * (-math.log(10000.0) / dim_model))                                  # (D/2,)
    pe = jnp.zeros((max_len, dim_model), dtype=jnp.float32)
    pe = pe.at[:, 0::2].set(jnp.sin(position * division_term))
    pe = pe.at[:, 1::2].set(jnp.cos(position * division_term))
    return pe.astype(dtype)   # (max_len, dim_model)


def _pick_tile_rows(S: int, row_bytes: int) -> int:
    """~4 MiB x-tiles: big enough to amortize per-step overhead (~0.35us),
    small enough that double-buffered x/pe/out stays well under 32 MiB."""
    target = 4 * 1024 * 1024
    ts = max(1, target // max(1, row_bytes))
    ts = min(ts, S)
    if S >= 8:
        ts = max(8, (ts // 8) * 8)       # sublane dim must stay (8)-aligned
    return int(ts)


def _make_index_map(num_zero_dims: int):
    def index_map(i, seed_ref):          # seed_ref: scalar-prefetch operand
        return (i,) + (0,) * num_zero_dims
    return index_map


def positional_encoding_forward(token_embedding, pos_table, *,
                                dropout_p=0.1, training=True, seed=0):
    """token_embedding: (S, B, D). Returns dropout(x + pos_table[:S])."""
    S, B, D = token_embedding.shape
    dtype = token_embedding.dtype
    pe = pos_table[:S].astype(dtype)     # ship the constant in activation dtype

    # Lane-dense layout: for small model dims, fold the batch into the lane axis
    # so the output's trailing dim is as wide as possible (unmasked stores).
    if D < 128:
        x_nd = token_embedding.reshape(S, B * D)
        pe_nd = jnp.tile(pe, (1, B))     # pe_nd[s, b*D + d] == pe[s, d]
    else:
        x_nd = token_embedding           # (B, D) trailing dims already dense
        pe_nd = pe                       # (S, D): broadcast inside the kernel

    row_elems = 1
    for dim in x_nd.shape[1:]:
        row_elems *= dim
    row_bytes = row_elems * jnp.dtype(dtype).itemsize

    ts = _pick_tile_rows(S, row_bytes)
    grid = (pl.cdiv(S, ts),)
    tile_elems = ts * row_elems

    def _spec(a):
        return pl.BlockSpec((ts,) + tuple(a.shape[1:]),
                            _make_index_map(a.ndim - 1))

    kernel = functools.partial(
        _pos_enc_kernel,
        dropout_p=float(dropout_p),
        training=bool(training),
        tile_elems=int(tile_elems),
    )

    seed_arr = jnp.array([seed], dtype=jnp.int32)

    out = pl.pallas_call(
        kernel,
        out_shape=jax.ShapeDtypeStruct(x_nd.shape, dtype),
        grid_spec=pltpu.PrefetchScalarGridSpec(
            num_scalar_prefetch=1,               # seed lands in SMEM
            grid=grid,
            in_specs=[_spec(x_nd), _spec(pe_nd)],
            out_specs=_spec(x_nd),
        ),
        compiler_params=pltpu.CompilerParams(
            dimension_semantics=("parallel",),   # shard grid across TCs on v7x
            vmem_limit_bytes=32 * 1024 * 1024,   # raise v5e's 16 MiB default
        ),
    )(seed_arr, x_nd, pe_nd)

    return out.reshape(S, B, D)


# ---------------------------------------------------------------------------
# Demo / correctness check
# ---------------------------------------------------------------------------
if __name__ == "__main__":
    seq_len, batch, dim_model = 8, 2, 32
    max_len = 64
    dropout_p = 0.1

    key = jax.random.PRNGKey(0)
    x = jax.random.normal(key, (seq_len, batch, dim_model), dtype=jnp.float32)

    pos_table = make_pos_encoding_table(dim_model, max_len)
    ref = x + pos_table[:seq_len][:, None, :]

    # Eval mode (dropout = identity): deterministic, check against pure-JAX ref.
    out_eval = positional_encoding_forward(
        x, pos_table, dropout_p=dropout_p, training=False)
    out_eval = jax.block_until_ready(out_eval)
    assert out_eval.shape == (seq_len, batch, dim_model)
    assert jnp.allclose(out_eval, ref, atol=1e-5, rtol=1e-5)

    # Training mode (dropout active). The RNG stream differs from torch's, but
    # surviving elements must equal ref / (1 - p) and dropped ones must be 0.
    out_train = positional_encoding_forward(
        x, pos_table, dropout_p=dropout_p, training=True, seed=1234)
    out_train = jax.block_until_ready(out_train)
    assert out_train.shape == (seq_len, batch, dim_model)
    keep_mask = out_train != 0
    scaled_ref = ref * (1.0 / (1.0 - dropout_p))
    assert jnp.allclose(jnp.where(keep_mask, out_train, 0.0),
                        jnp.where(keep_mask, scaled_ref, 0.0),
                        atol=1e-4, rtol=1e-4)

    print("KERNEL_OK")
</pallas_src>

<mosaic_0001>
module attributes {stable_mosaic.version = 11 : i64} {
  func.func @_pos_enc_kernel(%arg0: i32, %arg1: memref<1xi32, #tpu.memory_space<smem>>, %arg2: memref<8x64xf32, #tpu.memory_space<vmem>>, %arg3: memref<8x64xf32, #tpu.memory_space<vmem>>, %arg4: memref<8x64xf32, #tpu.memory_space<vmem>>) attributes {dimension_semantics = [#tpu.dimension_semantics<parallel>], iteration_bounds = array<i64: 1>, scalar_prefetch = 1 : i64, scratch_operands = 0 : i64, tpu.core_type = #tpu.core_type<tc>, window_params = [{transform_indices = @transform_0, window_bounds = array<i64: 8, 64>}, {transform_indices = @transform_1, window_bounds = array<i64: 8, 64>}, {transform_indices = @transform_2, window_bounds = array<i64: 8, 64>}]} {
    %c0 = arith.constant 0 : index
    %c0_0 = arith.constant 0 : index
    %0 = vector.load %arg2[%c0, %c0_0] : memref<8x64xf32, #tpu.memory_space<vmem>>, vector<8x64xf32>
    %c0_1 = arith.constant 0 : index
    %c0_2 = arith.constant 0 : index
    %1 = vector.load %arg3[%c0_1, %c0_2] : memref<8x64xf32, #tpu.memory_space<vmem>>, vector<8x64xf32>
    %2 = arith.addf %0, %1 : vector<8x64xf32>
    %c0_3 = arith.constant 0 : index
    %c0_4 = arith.constant 0 : index
    %3 = vector.load %arg4[%c0_3, %c0_4] : memref<8x64xf32, #tpu.memory_space<vmem>>, vector<8x64xf32>
    tpu.vector_store %arg4[%c0_3, %c0_4], %2 {strides = array<i32>} : memref<8x64xf32, #tpu.memory_space<vmem>>, vector<8x64xf32>,
    return
  }
  func.func @transform_0(%arg0: i32, %arg1: memref<1xi32, #tpu.memory_space<smem>>) -> (i32, i32) {
    %c0_i32 = arith.constant 0 : i32
    %c0_i32_0 = arith.constant 0 : i32
    return %arg0, %c0_i32 : i32, i32
  }
  func.func @transform_1(%arg0: i32, %arg1: memref<1xi32, #tpu.memory_space<smem>>) -> (i32, i32) {
    %c0_i32 = arith.constant 0 : i32
    %c0_i32_0 = arith.constant 0 : i32
    return %arg0, %c0_i32 : i32, i32
  }
  func.func @transform_2(%arg0: i32, %arg1: memref<1xi32, #tpu.memory_space<smem>>) -> (i32, i32) {
    %c0_i32 = arith.constant 0 : i32
    %c0_i32_0 = arith.constant 0 : i32
    return %arg0, %c0_i32 : i32, i32
  }
}

</mosaic_0001>

<llo_original>
// kernel: tpu_custom_call.1
$region0: #{tpu_custom_call.1}
  #allocation0 [shape = 'u32[]', space=smem, size = 0x4, offset = 0x4, fixed_abs, tag = 'smem constant byte address 0x4 - core index']
  #allocation1 [shape = 'u32[72,128]{1,0:T(1,128)}', space=vmem, size = 0x9000, scoped, tag = 'internal scratch']
  #allocation2 [shape = 's32[1]{0}', space=sflag, size = 0x4, scoped, tag = 'scoped memory for tpu_custom_call.1']
  #allocation3 [shape = 's32[1]{0:T(128)S(6)}', space=smem, size = 0x200, scoped, tag = 'prefetched SMEM operand 0']
  %s0 = inlined_call_operand.<no memory space> [shape: s32[1], index: 0, kind: input, shape index: {}]
  %s1 = inlined_call_operand.hbm [shape: f32[8,64], index: 1, kind: input, shape index: {}]
  %s2 = inlined_call_operand.hbm [shape: f32[8,64], index: 2, kind: input, shape index: {}]
  %s3 = inlined_call_operand.hbm [shape: f32[8,64], index: 3, kind: output, shape index: {}]
  %s4 = sld [smem:[#allocation0]]
  $region26: #{tpu_custom_call.1} parent=0
    _
  %s6 = ssub.s32 1, %s4
  %s7 = scalar_select 0, %s6, %s4
  %8 = sst [smem:[#allocation3]] %s0
  $region1: #{tpu_custom_call.1} parent=0
    #allocation4 [shape = 'u8[4096]{0}', space=vmem, size = 0x1000, scoped, tag = 'input window, operand 1, single buffered']
    #allocation5 [shape = 's32[1]{0}', space=sflag, size = 0x4, scoped, tag = 'scoped memory for tpu_custom_call.1']
    #allocation6 [shape = 's32[1]{0}', space=sflag, size = 0x4, scoped, tag = 'scoped memory for tpu_custom_call.1']
    #allocation7 [shape = 'u8[4096]{0}', space=vmem, size = 0x1000, scoped, tag = 'input window, operand 2, single buffered']
    #allocation8 [shape = 's32[1]{0}', space=sflag, size = 0x4, scoped, tag = 'scoped memory for tpu_custom_call.1']
    #allocation9 [shape = 'u8[4096]{0}', space=vmem, size = 0x1000, scoped, tag = 'output window, operand 0, single buffered']
    %9 = vsyncpa [#allocation5], 0
    %10 = vsyncpa [#allocation8], 0
    %11 = vsyncpa [#allocation6], 0
    // Predicated region
    $region2: #{tpu_custom_call.1} parent=1 // pred_check
      _
    $region3: #{tpu_custom_call.1} parent=1 // pred_check_branch
      %13 = sbr.rel (0) target = $region5
    $region4: #{tpu_custom_call.1} parent=1 // pred_region
      %15 = vsyncadd [#allocation5], 0
      %s17 = sshll.u32 %s1, 4
      %s18 = int_to_ptr.hbm [resolvable:$true] %s17
      %s19 = sshll.u32 [#allocation4], 4
      %s20 = int_to_ptr.vmem [resolvable:$true] %s19
      %22 = dma.hbm_to_vmem [thread:$0]  %s18, 128, %s20, [#allocation5]
    $region5: #{tpu_custom_call.1} parent=1 // pred_fallthru
      _
    // Predicated region
    $region6: #{tpu_custom_call.1} parent=1 // pred_check
      _
    $region7: #{tpu_custom_call.1} parent=1 // pred_check_branch
      %24 = sbr.rel (0) target = $region9
    $region8: #{tpu_custom_call.1} parent=1 // pred_region
      %26 = vsyncadd [#allocation8], 0
      %s28 = sshll.u32 %s2, 4
      %s29 = int_to_ptr.hbm [resolvable:$true] %s28
      %s30 = sshll.u32 [#allocation7], 4
      %s31 = int_to_ptr.vmem [resolvable:$true] %s30
      %33 = dma.hbm_to_vmem [thread:$0]  %s29, 128, %s31, [#allocation8]
    $region9: #{tpu_custom_call.1} parent=1 // pred_fallthru
      _
    // Predicated region
    $region10: #{tpu_custom_call.1} parent=1 // pred_check
      _
    $region11: #{tpu_custom_call.1} parent=1 // pred_check_branch
      %35 = sbr.rel (0) target = $region13
    $region12: #{tpu_custom_call.1} parent=1 // pred_region
      %37 = dma.done [#allocation5], 128
    $region13: #{tpu_custom_call.1} parent=1 // pred_fallthru
      _
    // Predicated region
    $region14: #{tpu_custom_call.1} parent=1 // pred_check
      _
    $region15: #{tpu_custom_call.1} parent=1 // pred_check_branch
      %39 = sbr.rel (0) target = $region17
    $region16: #{tpu_custom_call.1} parent=1 // pred_region
      %41 = dma.done [#allocation8], 128
    $region17: #{tpu_custom_call.1} parent=1 // pred_fallthru
      _
    %v42 = vld [vmem:[#allocation4] sm:$0xff]
    %v43 = vld [vmem:[#allocation7] sm:$0xff]
    %v44 = vadd.f32 %v42, %v43
    %vm45 = vcmask 523264
    %46 = vst.msk [vmem:[#allocation9] sm:$0xff] %vm45, %v44
    // Predicated region
    $region18: #{tpu_custom_call.1} parent=1 // pred_check
      _
    $region19: #{tpu_custom_call.1} parent=1 // pred_check_branch
      %48 = sbr.rel (0) target = $region21
    $region20: #{tpu_custom_call.1} parent=1 // pred_region
      %50 = vsyncadd [#allocation6], 0
      %s52 = sshll.u32 [#allocation9], 4
      %s53 = int_to_ptr.vmem [resolvable:$true] %s52
      %s54 = sshll.u32 %s3, 4
      %s55 = int_to_ptr.hbm [resolvable:$true] %s54
      %57 = dma.vmem_to_hbm [thread:$0]  %s53, 128, %s55, [#allocation6]
    $region21: #{tpu_custom_call.1} parent=1 // pred_fallthru
      _
    // Predicated region
    $region22: #{tpu_custom_call.1} parent=1 // pred_check
      _
    $region23: #{tpu_custom_call.1} parent=1 // pred_check_branch
      %59 = sbr.rel (0) target = $region25
    $region24: #{tpu_custom_call.1} parent=1 // pred_region
      %61 = dma.done [#allocation6], 128
    $region25: #{tpu_custom_call.1} parent=1 // pred_fallthru
      _
    %62 = vsyncpa [#allocation5], 1
    %63 = vsyncpa [#allocation8], 1
    %64 = vsyncpa [#allocation6], 1

</llo_original>
